<compile_context>
chip_gen: v7x
topology: tpu7x:2x2x1
jax: 0.10.0
libtpu: 0.0.40
codegen_flags: <defaults>
</compile_context>

<pallas_src>
import jax
import jax.numpy as jnp
from jax import lax
from jax.experimental import pallas as pl
from jax.experimental.pallas import tpu as pltpu


def _autolabeler_kernel(x_ref, p_ref, b2_ref, o_ref):
    # x: (B, V) [VMEM]   p: (H, V+2) = [w1 | b1 | w2] [VMEM]
    # b2: (1, 1) [SMEM]  o: (1, B) [VMEM]
    V = x_ref.shape[1]
    params = p_ref[...]
    w1 = params[:, :V]            # (H, V)
    b1 = params[:, V:V + 1]       # (H, 1)
    w2 = params[:, V + 1:V + 2]   # (H, 1)

    # linear1 on the MXU, contracting V on both operands -> (H, B) directly
    # (no pre-kernel transpose of x; f32 accumulation).
    h = lax.dot_general(
        w1, x_ref[...],
        dimension_numbers=(((1,), (1,)), ((), ())),
        preferred_element_type=jnp.float32,
    )
    h = jnp.maximum(h + b1, 0.0)  # bias broadcasts across lanes (batch); ReLU on VPU

    # linear2: output width is 1, so skip the MXU -> VPU multiply + sublane
    # reduce.  b2 is a scalar read from SMEM.
    logits = jnp.sum(h * w2, axis=0, keepdims=True) + b2_ref[0, 0]  # (1, B)

    # softmax over the batch axis (original dim=0), now the lane axis.
    # Exact divide: the denominator is a single scalar, approx buys nothing.
    m = jnp.max(logits, axis=1, keepdims=True)
    e = jnp.exp(logits - m)
    o_ref[...] = e / jnp.sum(e, axis=1, keepdims=True)


@jax.jit
def autolabeler_forward(x, w1, b1, w2, b2):
    """Forward pass matching the PyTorch AutoLabeler.

    Args (PyTorch-native parameter shapes):
      x : (B, V) float32
      w1: (H, V) float32   -- linear1.weight
      b1: (H,)   float32   -- linear1.bias
      w2: (1, H) float32   -- linear2.weight
      b2: (1,)   float32   -- linear2.bias
    Returns:
      (B, 1) float32, softmax taken along the batch axis (dim=0).
    """
    B, V = x.shape
    H = w1.shape[0]

    # Pack w1/b1/w2 into one VMEM operand; fused into this jit (no extra
    # dispatches, no standalone transpose op).
    packed = jnp.concatenate(
        [w1, b1.reshape(H, 1), w2.reshape(1, H).T], axis=1
    ).astype(jnp.float32)                       # (H, V + 2)
    b2s = b2.reshape(1, 1).astype(jnp.float32)  # SMEM scalar

    vmem = pl.BlockSpec(memory_space=pltpu.MemorySpace.VMEM)
    smem = pl.BlockSpec(memory_space=pltpu.MemorySpace.SMEM)

    cost = pl.CostEstimate(
        flops=2 * H * V * B + 3 * H * B + 4 * B,
        transcendentals=B,
        bytes_accessed=4 * (B * V + H * (V + 2) + 1 + B),
    )

    out_t = pl.pallas_call(
        _autolabeler_kernel,
        out_shape=jax.ShapeDtypeStruct((1, B), jnp.float32),  # batch on lanes
        in_specs=[vmem, vmem, smem],
        out_specs=vmem,
        cost_estimate=cost,
    )(x.astype(jnp.float32), packed, b2s)

    # Layout plumbing only: recover the PyTorch-shaped (B, 1) output.
    return out_t.reshape(B, 1)


def reference_forward(x, w1, b1, w2, b2):
    h = jnp.maximum(x @ w1.T + b1, 0.0)
    logits = h @ w2.T + b2
    return jax.nn.softmax(logits, axis=0)


if __name__ == "__main__":
    vocab_size = 32
    hidden_layer_size = 16
    batch_size = 8

    key = jax.random.PRNGKey(0)
    k_x, k_w1, k_b1, k_w2, k_b2 = jax.random.split(key, 5)

    # Deterministic PyTorch-Linear-like uniform init, native PyTorch shapes.
    bound1 = 1.0 / (vocab_size ** 0.5)
    bound2 = 1.0 / (hidden_layer_size ** 0.5)
    w1 = jax.random.uniform(k_w1, (hidden_layer_size, vocab_size),
                            jnp.float32, -bound1, bound1)   # linear1.weight
    b1 = jax.random.uniform(k_b1, (hidden_layer_size,),
                            jnp.float32, -bound1, bound1)   # linear1.bias
    w2 = jax.random.uniform(k_w2, (1, hidden_layer_size),
                            jnp.float32, -bound2, bound2)   # linear2.weight
    b2 = jax.random.uniform(k_b2, (1,),
                            jnp.float32, -bound2, bound2)   # linear2.bias

    x = jax.random.normal(k_x, (batch_size, vocab_size), jnp.float32)

    out = autolabeler_forward(x, w1, b1, w2, b2)
    out = jax.block_until_ready(out)

    ref = reference_forward(x, w1, b1, w2, b2)
    assert out.shape == (batch_size, 1)
    assert jnp.allclose(out, ref, atol=1e-5, rtol=1e-5), "mismatch vs reference"
    assert jnp.allclose(jnp.sum(out, axis=0), 1.0, atol=1e-5)

    print("KERNEL_OK")
</pallas_src>

<mosaic_0001>
module attributes {stable_mosaic.version = 11 : i64} {
  func.func @_autolabeler_kernel(%arg0: memref<8x32xf32, #tpu.memory_space<vmem>>, %arg1: memref<16x34xf32, #tpu.memory_space<vmem>>, %arg2: memref<1x1xf32, #tpu.memory_space<smem>>, %arg3: memref<1x8xf32, #tpu.memory_space<vmem>>) attributes {dimension_semantics = [], scalar_prefetch = 0 : i64, scratch_operands = 0 : i64, tpu.core_type = #tpu.core_type<tc>} {
    %c0 = arith.constant 0 : index
    %c0_0 = arith.constant 0 : index
    %0 = vector.load %arg1[%c0, %c0_0] : memref<16x34xf32, #tpu.memory_space<vmem>>, vector<16x34xf32>
    %1 = vector.extract_strided_slice %0 {offsets = [0, 0], sizes = [16, 32], strides = [1, 1]} : vector<16x34xf32> to vector<16x32xf32>
    %2 = vector.extract_strided_slice %0 {offsets = [0, 32], sizes = [16, 1], strides = [1, 1]} : vector<16x34xf32> to vector<16x1xf32>
    %3 = vector.extract_strided_slice %0 {offsets = [0, 33], sizes = [16, 1], strides = [1, 1]} : vector<16x34xf32> to vector<16x1xf32>
    %c0_1 = arith.constant 0 : index
    %c0_2 = arith.constant 0 : index
    %4 = vector.load %arg0[%c0_1, %c0_2] : memref<8x32xf32, #tpu.memory_space<vmem>>, vector<8x32xf32>
    %cst = arith.constant dense<0.000000e+00> : vector<16x8xf32>
    %5 = tpu.matmul %1, %4, %cst {dimension_numbers = #tpu.dot_dimension_numbers<[1], [1], [0], [0], [0, 0, 1, 0], [], []>} : vector<16x32xf32>, vector<8x32xf32>, vector<16x8xf32> -> vector<16x8xf32>
    %6 = vector.broadcast %2 : vector<16x1xf32> to vector<16x8xf32>
    %7 = arith.addf %5, %6 : vector<16x8xf32>
    %cst_3 = arith.constant 0.000000e+00 : f32
    %8 = vector.broadcast %cst_3 : f32 to vector<16x8xf32>
    %9 = arith.maximumf %7, %8 : vector<16x8xf32>
    %10 = vector.broadcast %3 : vector<16x1xf32> to vector<16x8xf32>
    %11 = arith.mulf %9, %10 : vector<16x8xf32>
    %cst_4 = arith.constant dense<0.000000e+00> : vector<8xf32>
    %12 = vector.multi_reduction <add>, %11, %cst_4 [0] : vector<16x8xf32> to vector<8xf32>
    %13 = vector.shape_cast %12 : vector<8xf32> to vector<1x8xf32>
    %c0_5 = arith.constant 0 : index
    %c0_6 = arith.constant 0 : index
    %14 = memref.load %arg2[%c0_5, %c0_6] : memref<1x1xf32, #tpu.memory_space<smem>>
    %15 = vector.broadcast %14 : f32 to vector<1x8xf32>
    %16 = arith.addf %13, %15 : vector<1x8xf32>
    %cst_7 = arith.constant dense<0xFF800000> : vector<1xf32>
    %17 = vector.multi_reduction <maximumf>, %16, %cst_7 [1] : vector<1x8xf32> to vector<1xf32>
    %18 = vector.shape_cast %17 : vector<1xf32> to vector<1x1xf32>
    %19 = vector.broadcast %18 : vector<1x1xf32> to vector<1x8xf32>
    %20 = arith.subf %16, %19 : vector<1x8xf32>
    %21 = math.exp %20 : vector<1x8xf32>
    %cst_8 = arith.constant dense<0.000000e+00> : vector<1xf32>
    %22 = vector.multi_reduction <add>, %21, %cst_8 [1] : vector<1x8xf32> to vector<1xf32>
    %23 = vector.shape_cast %22 : vector<1xf32> to vector<1x1xf32>
    %24 = vector.broadcast %23 : vector<1x1xf32> to vector<1x8xf32>
    %25 = arith.divf %21, %24 : vector<1x8xf32>
    %c0_9 = arith.constant 0 : index
    %c0_10 = arith.constant 0 : index
    %26 = vector.load %arg3[%c0_9, %c0_10] : memref<1x8xf32, #tpu.memory_space<vmem>>, vector<1x8xf32>
    tpu.vector_store %arg3[%c0_9, %c0_10], %25 {strides = array<i32>} : memref<1x8xf32, #tpu.memory_space<vmem>>, vector<1x8xf32>,
    return
  }
}

</mosaic_0001>

<llo_original>
// kernel: autolabeler_forward.1
$region0: #{autolabeler_forward.1}
  #allocation0 [shape = 'u32[]', space=smem, size = 0x4, offset = 0x4, fixed_abs, tag = 'smem constant byte address 0x4 - core index']
  #allocation1 [shape = 'u32[144,128]{1,0:T(1,128)}', space=vmem, size = 0x12000, scoped, tag = 'internal scratch']
  #allocation2 [shape = 'f32[1,1]{1,0:T(1,128)S(6)}', space=smem, size = 0x200, scoped, tag = 'scoped memory for autolabeler_forward.1']
  %s0 = inlined_call_operand.vmem [shape: f32[8,32], index: 0, kind: input, shape index: {}]
  %s1 = inlined_call_operand.vmem [shape: f32[16,34], index: 1, kind: input, shape index: {}]
  %s2 = inlined_call_operand.<no memory space> [shape: f32[1,1], index: 2, kind: input, shape index: {}]
  %s3 = inlined_call_operand.hbm [shape: f32[1,8], index: 3, kind: output, shape index: {}]
  %s4 = sld [smem:[#allocation0]]
  $region22: #{autolabeler_forward.1} parent=0
    _
  %s6 = ssub.s32 1, %s4
  %s7 = scalar_select 0, %s6, %s4
  %8 = sst [smem:[#allocation2]] %s2
  $region1: #{autolabeler_forward.1} parent=0
    #allocation3 [shape = 'u8[512]{0}', space=vmem, size = 0x400, scoped, tag = 'output window, operand 0, single buffered']
    #allocation4 [shape = 's32[1]{0}', space=sflag, size = 0x4, scoped, tag = 'scoped memory for autolabeler_forward.1']
    %9 = vsyncpa [#allocation4], 0
    // Predicated region
    $region2: #{autolabeler_forward.1} parent=1 // pred_check
      _
    $region3: #{autolabeler_forward.1} parent=1 // pred_check_branch
      %11 = sbr.rel (0) target = $region5
    $region4: #{autolabeler_forward.1} parent=1 // pred_region
      _
    $region5: #{autolabeler_forward.1} parent=1 // pred_fallthru
      _
    // Predicated region
    $region6: #{autolabeler_forward.1} parent=1 // pred_check
      _
    $region7: #{autolabeler_forward.1} parent=1 // pred_check_branch
      %13 = sbr.rel (0) target = $region9
    $region8: #{autolabeler_forward.1} parent=1 // pred_region
      _
    $region9: #{autolabeler_forward.1} parent=1 // pred_fallthru
      _
    // Predicated region
    $region10: #{autolabeler_forward.1} parent=1 // pred_check
      _
    $region11: #{autolabeler_forward.1} parent=1 // pred_check_branch
      %15 = sbr.rel (0) target = $region13
    $region12: #{autolabeler_forward.1} parent=1 // pred_region
      _
    $region13: #{autolabeler_forward.1} parent=1 // pred_fallthru
      _
    %v16 = vld [vmem:[%s1] sm:$0xff]
    %v17 = vld [vmem:[%s1 + $0x8] sm:$0xff]
    %v18 = vld [vmem:[%s0] sm:$0xff]
    %20 = vset.pattern.permute.xlu0 32
    %21 = vperm.xlu0 %20, %v16
    %v22 = vpop.permute.xlu0 %21
    %25 = vset.pattern.permute.xlu0 32
    %26 = vperm.xlu0 %25, %v17
    %v27 = vpop.permute.xlu0 %26
    %vm29 = vcmask 261120
    %v30 = vsel %vm29, %v16, 0
    %v32 = vsel %vm29, %v17, 0
    %v35 = vsel %vm29, %v18, 0
    %37 = vmatprep.subr.mxu0 0.0
    %38 = vmatpush1.xpose.msra.mxu0 %v35
    %39 = vmatprep.subr.mxu0 0.0
    %40 = vmatpush1.xpose.msra.mxu0 0.0
    %41 = vmatprep.subr.mxu0 0.0
    %42 = vmatpush1.xpose.msra.mxu0 0.0
    %43 = vmatprep.subr.mxu0 0.0
    %44 = vmatpush1.xpose.msra.mxu0 0.0
    %45 = vmatprep.subr.mxu0 0.0
    %46 = vmatpush1.xpose.msra.mxu0 0.0
    %47 = vmatprep.subr.mxu0 0.0
    %48 = vmatpush1.xpose.msra.mxu0 0.0
    %49 = vmatprep.subr.mxu0 0.0
    %50 = vmatpush1.xpose.msra.mxu0 0.0
    %51 = vmatprep.subr.mxu0 0.0
    %52 = vmatpush1.xpose.msra.mxu0 0.0
    %53 = vmatprep.subr.mxu0 0.0
    %54 = vmatpush1.xpose.msra.mxu0 0.0
    %55 = vmatprep.subr.mxu0 0.0
    %56 = vmatpush1.xpose.msra.mxu0 0.0
    %57 = vmatprep.subr.mxu0 0.0
    %58 = vmatpush1.xpose.msra.mxu0 0.0
    %59 = vmatprep.subr.mxu0 0.0
    %60 = vmatpush1.xpose.msra.mxu0 0.0
    %61 = vmatprep.subr.mxu0 0.0
    %62 = vmatpush1.xpose.msra.mxu0 0.0
    %63 = vmatprep.subr.mxu0 0.0
    %64 = vmatpush1.xpose.msra.mxu0 0.0
    %65 = vmatprep.subr.mxu0 0.0
    %66 = vmatpush1.xpose.msra.mxu0 0.0
    %67 = vmatprep.subr.mxu0 0.0
    %68 = vmatpush1.xpose.msra.mxu0 0.0
    %69 = vmatprep.subr.mxu0 0.0
    %70 = vmatpush1.xpose.msra.mxu0 0.0
    %71 = vmatprep.subr.mxu0 0.0
    %72 = vmatpush1.xpose.msra.mxu0 0.0
    %73 = vmatprep.subr.mxu0 0.0
    %74 = vmatpush1.xpose.msra.mxu0 0.0
    %75 = vmatprep.subr.mxu0 0.0
    %76 = vmatpush1.xpose.msra.mxu0 0.0
    %77 = vmatprep.subr.mxu0 0.0
    %78 = vmatpush1.xpose.msra.mxu0 0.0
    %79 = vmatprep.subr.mxu0 0.0
    %80 = vmatpush1.xpose.msra.mxu0 0.0
    %81 = vmatprep.subr.mxu0 0.0
    %82 = vmatpush1.xpose.msra.mxu0 0.0
    %83 = vmatprep.subr.mxu0 0.0
    %84 = vmatpush1.xpose.msra.mxu0 0.0
    %85 = vmatprep.subr.mxu0 0.0
    %86 = vmatpush1.xpose.msra.mxu0 0.0
    %87 = vmatprep.subr.mxu0 0.0
    %88 = vmatpush1.xpose.msra.mxu0 0.0
    %89 = vmatprep.subr.mxu0 0.0
    %90 = vmatpush1.xpose.msra.mxu0 0.0
    %91 = vmatprep.subr.mxu0 0.0
    %92 = vmatpush1.xpose.msra.mxu0 0.0
    %93 = vmatprep.subr.mxu0 0.0
    %94 = vmatpush1.xpose.msra.mxu0 0.0
    %95 = vmatprep.subr.mxu0 0.0
    %96 = vmatpush1.xpose.msra.mxu0 0.0
    %97 = vmatprep.subr.mxu0 0.0
    %98 = vmatpush1.xpose.msra.mxu0 0.0
    %99 = vmatprep.subr.mxu0 0.0
    %100 = vmatpush1.xpose.msra.mxu0 0.0
    %101 = vmatprep.mubr.f32.mxu0 0.0
    %102 = vmatmul.mubr.f32.gmra.mrb[0].mxu0 %v30
    %v103 = vpop.f32.mrb[0].mxu0
    %v104 = vadd.f32 %v22, %v103
    %v105 = vpop.f32.mrb[0].mxu0
    %106 = vmatprep.mubr.f32.mxu0 0.0
    %107 = vmatmul.mubr.f32.gmra.mrb[0].mxu0 %v32
    %v108 = vpop.f32.mrb[0].mxu0
    %v109 = vadd.f32 %v27, %v108
    %v110 = vpop.f32.mrb[0].mxu0
    %111 = vdwg.mxu0
    %v112 = vmax.f32 %v104, 0.0
    %v113 = vmax.f32 %v109, 0.0
    %114 = vset.pattern.permute.xlu0 33
    %115 = vperm.xlu0 %114, %v16
    %v116 = vpop.permute.xlu0 %115
    %118 = vset.pattern.permute.xlu0 33
    %119 = vperm.xlu0 %118, %v17
    %v120 = vpop.permute.xlu0 %119
    %v122 = vmul.f32 %v112, %v116
    %v123 = vmul.f32 %v113, %v120
    %vm124 = vcmask 64512
    %v125 = vsel %vm124, %v122, 0.0
    %v126 = vsel %vm124, %v123, 0.0
    %v127 = vadd.f32 %v125, %v126
    %v128 = vrot.slane %v127, 4
    %v129 = vadd.f32 %v127, %v128
    %v130 = vrot.slane %v129, 2
    %v131 = vadd.f32 %v129, %v130
    %v132 = vrot.slane %v131, 1
    %v133 = vadd.f32 %v131, %v132
    %s134 = sld [smem:[#allocation2]]
    %v135 = vstv %s134
    %v136 = vadd.f32 %v133, %v135
    %v137 = vsel %vm124, %v136, -inf
    %138 = vmax.xlane.f32.xlu0 %v137
    %v139 = vpop.xlane.xlu0 %138
    %v140 = vsub.f32 %v136, %v139
    %v141 = vmul.f32 %v140, 1.442695
    %v142 = vpow.pop %v141
    %v143 = vsel %vm124, %v142, 0.0
    %144 = vadd.xlane.f32.xlu0 %v143
    %v145 = vpop.xlane.xlu0 %144
    %v146 = vrcp.pop %v145
    %v147 = vmul.f32 %v142, %v146
    %vm148 = vcmask 57344
    %149 = vst.msk [vmem:[#allocation3] sm:$0x1] %vm148, %v147
    // Predicated region
    $region14: #{autolabeler_forward.1} parent=1 // pred_check
      _
    $region15: #{autolabeler_forward.1} parent=1 // pred_check_branch
      %151 = sbr.rel (0) target = $region17
    $region16: #{autolabeler_forward.1} parent=1 // pred_region
      %s153 = ssub.s32 16, 16
      %154 = vsyncadd [#allocation4], %s153
      %s156 = sshll.u32 [#allocation3], 4
      %s157 = int_to_ptr.vmem [resolvable:$true] %s156
      %159 = dma.vmem_to_hbm [thread:$0]  %s157, 16, %s3, [#allocation4]
    $region17: #{autolabeler_forward.1} parent=1 // pred_fallthru
      _
    // Predicated region
    $region18: #{autolabeler_forward.1} parent=1 // pred_check
      _
    $region19: #{autolabeler_forward.1} parent=1 // pred_check_branch
      %161 = sbr.rel (0) target = $region21
    $region20: #{autolabeler_forward.1} parent=1 // pred_region
      %162 = dma.done [#allocation4], 16
    $region21: #{autolabeler_forward.1} parent=1 // pred_fallthru
      _
    %163 = vsyncpa [#allocation4], 1

</llo_original>
